<compile_context>
chip_gen: v5e
topology: v5e:2x2
jax: 0.10.0
libtpu: 0.0.40
codegen_flags: <defaults>
</compile_context>

<pallas_src>
import functools

import jax
import jax.numpy as jnp
from jax import lax
from jax.experimental import pallas as pl
from jax.experimental.pallas import tpu as pltpu


def _spatial_transform_kernel(x_ref, g_ref, o_ref, *, v_size, tqs):
    # x_ref: (1, C*Vp, M)  image, rows = (channel, VPU-dim row), cols = MXU dim
    # g_ref: (1, 2, TQ)    coords: row 0 = along-M coordinate, row 1 = along-V
    # o_ref: (1, C, TQ)    lane-dense output tile
    _, CV, M = x_ref.shape
    _, C, TQ = o_ref.shape
    Vp = CV // C

    # Hoisted once per grid step (no-op cast for f32 inputs).
    x2d = x_ref[0].astype(jnp.float32)                       # (C*Vp, M)

    # Fused stage-1/stage-2 over static q sub-chunks: never materialize the
    # full (C*Vp, TQ) intermediate.
    for s in range(TQ // tqs):
        q0 = s * tqs                                         # static -> static slices
        g = g_ref[0, :, pl.ds(q0, tqs)].astype(jnp.float32)  # (2, tqs)
        gm = g[0:1, :]                                       # coord along M (MXU)
        gv = g[1:2, :]                                       # coord along V (VPU)

        # align_corners=True un-normalization + padding_mode='border' clamp.
        im = jnp.clip((gm + 1.0) * ((M - 1) * 0.5), 0.0, float(M - 1))
        iv = jnp.clip((gv + 1.0) * ((v_size - 1) * 0.5), 0.0, float(v_size - 1))

        # Hat-function separable bilinear weights (border duplicates handled
        # implicitly because im/iv are pre-clamped).
        mi = lax.broadcasted_iota(jnp.int32, (M, tqs), 0).astype(jnp.float32)
        wm = jnp.maximum(1.0 - jnp.abs(mi - im), 0.0)        # (M, tqs)
        vi = lax.broadcasted_iota(jnp.int32, (Vp, tqs), 0).astype(jnp.float32)
        wv = jnp.maximum(1.0 - jnp.abs(vi - iv), 0.0)        # (Vp, tqs); pad rows -> 0

        # Stage 1 (MXU): contract M.
        d = jnp.dot(x2d, wm, preferred_element_type=jnp.float32)   # (C*Vp, tqs)
        # Stage 2 (VPU + sublane reduce): weight by wv, reduce V per channel.
        out = jnp.sum(d.reshape(C, Vp, tqs) * wv[None, :, :], axis=1)  # (C, tqs)

        o_ref[0, :, pl.ds(q0, tqs)] = out.astype(o_ref.dtype)


def _choose_tiles(N, C, Vp, M, Q, x_itemsize, out_itemsize, vmem_limit):
    """Pick (TQ, TQS): grid-level q tile and in-kernel q sub-chunk."""
    lane = 128

    # Inner sub-chunk: keep the fused per-chunk working set
    # (d + product + weight maps + out chunk) around ~1 MiB.
    sub_per_lane = (2 * C * Vp + M + Vp + 3 * C) * 4
    tqs = 512
    while tqs > lane and tqs * sub_per_lane > (1 << 20):
        tqs //= 2

    # Grid-level tile from the VMEM budget.  Fixed: double-buffered x block +
    # sub-chunk temps + headroom.  Scaling with TQ: double-buffered g + out.
    fixed = 2 * C * Vp * M * x_itemsize + tqs * sub_per_lane + (2 << 20)
    per_lane = 2 * (2 * 4 + C * out_itemsize)
    avail = vmem_limit - fixed
    if avail > per_lane * lane:
        tq = ((avail // per_lane) // lane) * lane
    else:
        tq = lane
    tq = int(max(lane, min(tq, 4096)))

    # Never exceed (128-padded) Q.
    q_pad = -(-Q // lane) * lane
    tq = min(tq, q_pad)

    # Megacore (v7x): aim for >= 4 grid steps so both TensorCores get work.
    while tq > lane and N * (-(-Q // tq)) < 4:
        tq = max(lane, ((tq // 2) // lane) * lane)

    # Inner chunk must divide the grid tile.
    if tq % tqs != 0:
        if tq > tqs:
            tq = (tq // tqs) * tqs
        else:
            tqs = tq
    return tq, tqs


def spatial_transform(x, flow, sample_grid):
    """Pallas equivalent of SpatialTransform_unit.forward(x, flow, sample_grid)."""
    N, C, H, W = x.shape
    _, Ho, Wo, _ = sample_grid.shape
    Q = Ho * Wo

    # Layout plumbing in plain XLA (cheap, fused).
    g = sample_grid.astype(jnp.float32) + flow.astype(jnp.float32)   # (N,Ho,Wo,2)
    g = g.reshape(N, Q, 2)

    # Put the larger spatial dim on the MXU contraction (M), the smaller on
    # the VPU reduction (V); swap coordinate roles to match.
    if H > W:
        xs = jnp.transpose(x, (0, 1, 3, 2))      # (N, C, W, H)
        V, M = W, H
        g = g[..., ::-1]                          # row 0 -> along-M (y), row 1 -> along-V (x)
    else:
        xs = x                                    # (N, C, H, W)
        V, M = H, W

    # Pad the VPU (sublane-split) dim to a multiple of 8 (relayout-free reshape).
    Vp = -(-V // 8) * 8
    if Vp != V:
        xs = jnp.pad(xs, ((0, 0), (0, 0), (0, Vp - V), (0, 0)))
    x2d = xs.reshape(N, C * Vp, M)

    # Per-chip VMEM budget.
    try:
        vmem_cap = int(pltpu.get_tpu_info().vmem_capacity_bytes)
    except Exception:
        vmem_cap = 64 * 1024 * 1024
    vmem_limit = int(min(vmem_cap // 2, 48 * 1024 * 1024))

    TQ, TQS = _choose_tiles(N, C, Vp, M, Q, x2d.dtype.itemsize,
                            x.dtype.itemsize, vmem_limit)

    # Pad Q to a multiple of TQ (lane-dense, unmasked stores), slice after.
    Qp = -(-Q // TQ) * TQ
    gT = jnp.transpose(g, (0, 2, 1))                                  # (N, 2, Q)
    if Qp != Q:
        gT = jnp.pad(gT, ((0, 0), (0, 0), (0, Qp - Q)))

    # Advisory cost.
    flops = N * Qp * (2 * C * Vp * M + 2 * C * Vp + 4 * (M + Vp))
    bytes_accessed = (x2d.size * x2d.dtype.itemsize
                      + gT.size * gT.dtype.itemsize
                      + N * C * Qp * x.dtype.itemsize)

    kernel = functools.partial(_spatial_transform_kernel, v_size=V, tqs=TQS)

    out = pl.pallas_call(
        kernel,
        out_shape=jax.ShapeDtypeStruct((N, C, Qp), x.dtype),
        grid_spec=pltpu.PrefetchScalarGridSpec(
            num_scalar_prefetch=0,
            grid=(N, Qp // TQ),          # q innermost: x block re-fetched only on new n
            in_specs=[
                pl.BlockSpec((1, C * Vp, M), lambda n, q: (n, 0, 0)),
                pl.BlockSpec((1, 2, TQ), lambda n, q: (n, 0, q)),
            ],
            out_specs=pl.BlockSpec((1, C, TQ), lambda n, q: (n, 0, q)),
        ),
        compiler_params=pltpu.CompilerParams(
            dimension_semantics=("parallel", "parallel"),
            vmem_limit_bytes=vmem_limit,
        ),
        cost_estimate=pl.CostEstimate(
            flops=int(flops), transcendentals=0,
            bytes_accessed=int(bytes_accessed)),
    )(x2d, gT)

    return out[:, :, :Q].reshape(N, C, Ho, Wo)


def _reference(x, flow, sample_grid):
    # Pure-JAX reference (torch grid_sample bilinear / border / align_corners=True).
    N, C, H, W = x.shape
    g = sample_grid + flow
    ix = jnp.clip((g[..., 0] + 1.0) * (W - 1) * 0.5, 0.0, W - 1)
    iy = jnp.clip((g[..., 1] + 1.0) * (H - 1) * 0.5, 0.0, H - 1)
    x0 = jnp.floor(ix).astype(jnp.int32)
    y0 = jnp.floor(iy).astype(jnp.int32)
    x1 = jnp.minimum(x0 + 1, W - 1)
    y1 = jnp.minimum(y0 + 1, H - 1)
    wx1 = ix - x0
    wx0 = 1.0 - wx1
    wy1 = iy - y0
    wy0 = 1.0 - wy1

    def gather(yi, xi):
        flat = x.reshape(N, C, H * W)
        idx = (yi * W + xi)[:, None, :, :]
        idx = jnp.broadcast_to(idx, (N, C) + idx.shape[2:])
        return jnp.take_along_axis(flat, idx.reshape(N, C, -1), axis=2).reshape(
            N, C, idx.shape[2], idx.shape[3])

    v00 = gather(y0, x0)
    v01 = gather(y0, x1)
    v10 = gather(y1, x0)
    v11 = gather(y1, x1)
    w00 = (wy0 * wx0)[:, None]
    w01 = (wy0 * wx1)[:, None]
    w10 = (wy1 * wx0)[:, None]
    w11 = (wy1 * wx1)[:, None]
    return v00 * w00 + v01 * w01 + v10 * w10 + v11 * w11


if __name__ == "__main__":
    key = jax.random.PRNGKey(0)
    k1, k2, k3, k4, k5 = jax.random.split(key, 5)

    # ---- test 1: square image, identity grid + small random flow ----------
    N, C, H, W = 2, 4, 16, 16
    Ho, Wo = 16, 16
    x = jax.random.normal(k1, (N, C, H, W), dtype=jnp.float32)
    ys = jnp.linspace(-1.0, 1.0, Ho)
    xs = jnp.linspace(-1.0, 1.0, Wo)
    gy, gx = jnp.meshgrid(ys, xs, indexing="ij")
    sample_grid = jnp.broadcast_to(
        jnp.stack([gx, gy], axis=-1)[None], (N, Ho, Wo, 2)).astype(jnp.float32)
    flow = 0.1 * jax.random.normal(k2, (N, Ho, Wo, 2), dtype=jnp.float32)

    out = spatial_transform(x, flow, sample_grid)
    jax.block_until_ready(out)
    ref = _reference(x, flow, sample_grid)
    assert out.shape == (N, C, Ho, Wo)
    assert jnp.allclose(out, ref, atol=1e-3, rtol=1e-3), float(
        jnp.max(jnp.abs(out - ref)))

    # ---- test 2: non-square (H > W swap path), padded V/Q, border clamp ----
    N2, C2, H2, W2 = 1, 3, 12, 7
    Ho2, Wo2 = 5, 9
    x2 = jax.random.normal(k3, (N2, C2, H2, W2), dtype=jnp.float32)
    grid2 = jax.random.uniform(k4, (N2, Ho2, Wo2, 2), dtype=jnp.float32,
                               minval=-1.3, maxval=1.3)
    flow2 = 0.2 * jax.random.normal(k5, (N2, Ho2, Wo2, 2), dtype=jnp.float32)

    out2 = spatial_transform(x2, flow2, grid2)
    jax.block_until_ready(out2)
    ref2 = _reference(x2, flow2, grid2)
    assert out2.shape == (N2, C2, Ho2, Wo2)
    assert jnp.allclose(out2, ref2, atol=1e-3, rtol=1e-3), float(
        jnp.max(jnp.abs(out2 - ref2)))

    print("KERNEL_OK")
</pallas_src>

<mosaic_0001>
module attributes {stable_mosaic.version = 11 : i64} {
  func.func @_spatial_transform_kernel(%arg0: i32, %arg1: i32, %arg2: memref<1x64x16xf32, #tpu.memory_space<vmem>>, %arg3: memref<1x2x128xf32, #tpu.memory_space<vmem>>, %arg4: memref<1x4x128xf32, #tpu.memory_space<vmem>>) attributes {dimension_semantics = [#tpu.dimension_semantics<parallel>, #tpu.dimension_semantics<parallel>], iteration_bounds = array<i64: 2, 2>, scalar_prefetch = 0 : i64, scratch_operands = 0 : i64, tpu.core_type = #tpu.core_type<tc>, window_params = [{transform_indices = @transform_0, window_bounds = array<i64: 1, 64, 16>}, {transform_indices = @transform_1, window_bounds = array<i64: 1, 2, 128>}, {transform_indices = @transform_2, window_bounds = array<i64: 1, 4, 128>}]} {
    %c0 = arith.constant 0 : index
    %c0_0 = arith.constant 0 : index
    %c0_1 = arith.constant 0 : index
    %0 = vector.load %arg2[%c0, %c0_0, %c0_1] : memref<1x64x16xf32, #tpu.memory_space<vmem>>, vector<1x64x16xf32>
    %1 = vector.shape_cast %0 : vector<1x64x16xf32> to vector<64x16xf32>
    %c0_2 = arith.constant 0 : index
    %c0_3 = arith.constant 0 : index
    %c0_4 = arith.constant 0 : index
    %2 = vector.load %arg3[%c0_2, %c0_3, %c0_4] : memref<1x2x128xf32, #tpu.memory_space<vmem>>, vector<1x2x128xf32>
    %3 = vector.shape_cast %2 : vector<1x2x128xf32> to vector<2x128xf32>
    %4 = vector.extract_strided_slice %3 {offsets = [0, 0], sizes = [1, 128], strides = [1, 1]} : vector<2x128xf32> to vector<1x128xf32>
    %5 = vector.extract_strided_slice %3 {offsets = [1, 0], sizes = [1, 128], strides = [1, 1]} : vector<2x128xf32> to vector<1x128xf32>
    %cst = arith.constant 1.000000e+00 : f32
    %6 = vector.broadcast %cst : f32 to vector<1x128xf32>
    %7 = arith.addf %4, %6 : vector<1x128xf32>
    %cst_5 = arith.constant 7.500000e+00 : f32
    %8 = vector.broadcast %cst_5 : f32 to vector<1x128xf32>
    %9 = arith.mulf %7, %8 : vector<1x128xf32>
    %cst_6 = arith.constant 0.000000e+00 : f32
    %cst_7 = arith.constant 1.500000e+01 : f32
    %10 = vector.broadcast %cst_6 : f32 to vector<1x128xf32>
    %11 = arith.maximumf %10, %9 : vector<1x128xf32>
    %12 = vector.broadcast %cst_7 : f32 to vector<1x128xf32>
    %13 = arith.minimumf %12, %11 : vector<1x128xf32>
    %cst_8 = arith.constant 1.000000e+00 : f32
    %14 = vector.broadcast %cst_8 : f32 to vector<1x128xf32>
    %15 = arith.addf %5, %14 : vector<1x128xf32>
    %cst_9 = arith.constant 7.500000e+00 : f32
    %16 = vector.broadcast %cst_9 : f32 to vector<1x128xf32>
    %17 = arith.mulf %15, %16 : vector<1x128xf32>
    %cst_10 = arith.constant 0.000000e+00 : f32
    %cst_11 = arith.constant 1.500000e+01 : f32
    %18 = vector.broadcast %cst_10 : f32 to vector<1x128xf32>
    %19 = arith.maximumf %18, %17 : vector<1x128xf32>
    %20 = vector.broadcast %cst_11 : f32 to vector<1x128xf32>
    %21 = arith.minimumf %20, %19 : vector<1x128xf32>
    %22 = tpu.iota {dimensions = array<i32: 0>} : vector<16x128xi32>
    %23 = arith.sitofp %22 : vector<16x128xi32> to vector<16x128xf32>
    %24 = vector.broadcast %13 : vector<1x128xf32> to vector<16x128xf32>
    %25 = arith.subf %23, %24 : vector<16x128xf32>
    %26 = math.absf %25 : vector<16x128xf32>
    %cst_12 = arith.constant 1.000000e+00 : f32
    %27 = vector.broadcast %cst_12 : f32 to vector<16x128xf32>
    %28 = arith.subf %27, %26 : vector<16x128xf32>
    %cst_13 = arith.constant 0.000000e+00 : f32
    %29 = vector.broadcast %cst_13 : f32 to vector<16x128xf32>
    %30 = arith.maximumf %28, %29 : vector<16x128xf32>
    %31 = tpu.iota {dimensions = array<i32: 0>} : vector<16x128xi32>
    %32 = arith.sitofp %31 : vector<16x128xi32> to vector<16x128xf32>
    %33 = vector.broadcast %21 : vector<1x128xf32> to vector<16x128xf32>
    %34 = arith.subf %32, %33 : vector<16x128xf32>
    %35 = math.absf %34 : vector<16x128xf32>
    %cst_14 = arith.constant 1.000000e+00 : f32
    %36 = vector.broadcast %cst_14 : f32 to vector<16x128xf32>
    %37 = arith.subf %36, %35 : vector<16x128xf32>
    %cst_15 = arith.constant 0.000000e+00 : f32
    %38 = vector.broadcast %cst_15 : f32 to vector<16x128xf32>
    %39 = arith.maximumf %37, %38 : vector<16x128xf32>
    %cst_16 = arith.constant dense<0.000000e+00> : vector<64x128xf32>
    %40 = tpu.matmul %1, %30, %cst_16 {dimension_numbers = #tpu.dot_dimension_numbers<[1], [0], [0], [1], [0, 0, 1, 1], [], []>} : vector<64x16xf32>, vector<16x128xf32>, vector<64x128xf32> -> vector<64x128xf32>
    %41 = vector.shape_cast %40 : vector<64x128xf32> to vector<4x16x128xf32>
    %42 = vector.shape_cast %39 : vector<16x128xf32> to vector<1x16x128xf32>
    %43 = vector.broadcast %42 : vector<1x16x128xf32> to vector<4x16x128xf32>
    %44 = arith.mulf %41, %43 : vector<4x16x128xf32>
    %cst_17 = arith.constant dense<0.000000e+00> : vector<4x128xf32>
    %45 = vector.multi_reduction <add>, %44, %cst_17 [1] : vector<4x16x128xf32> to vector<4x128xf32>
    %c0_18 = arith.constant 0 : index
    %c0_19 = arith.constant 0 : index
    %c0_20 = arith.constant 0 : index
    %46 = vector.load %arg4[%c0_18, %c0_19, %c0_20] : memref<1x4x128xf32, #tpu.memory_space<vmem>>, vector<1x4x128xf32>
    %47 = vector.shape_cast %46 : vector<1x4x128xf32> to vector<4x128xf32>
    %48 = vector.shape_cast %45 : vector<4x128xf32> to vector<1x4x128xf32>
    tpu.vector_store %arg4[%c0_18, %c0_19, %c0_20], %48 {strides = array<i32>} : memref<1x4x128xf32, #tpu.memory_space<vmem>>, vector<1x4x128xf32>,
    return
  }
  func.func @transform_0(%arg0: i32, %arg1: i32) -> (i32, i32, i32) {
    %c0_i32 = arith.constant 0 : i32
    %c0_i32_0 = arith.constant 0 : i32
    %c0_i32_1 = arith.constant 0 : i32
    return %arg0, %c0_i32, %c0_i32_0 : i32, i32, i32
  }
  func.func @transform_1(%arg0: i32, %arg1: i32) -> (i32, i32, i32) {
    %c0_i32 = arith.constant 0 : i32
    %c0_i32_0 = arith.constant 0 : i32
    return %arg0, %c0_i32, %arg1 : i32, i32, i32
  }
  func.func @transform_2(%arg0: i32, %arg1: i32) -> (i32, i32, i32) {
    %c0_i32 = arith.constant 0 : i32
    %c0_i32_0 = arith.constant 0 : i32
    return %arg0, %c0_i32, %arg1 : i32, i32, i32
  }
}

</mosaic_0001>

<llo_original>
// kernel: tpu_custom_call.1
$region0: #{tpu_custom_call.1}
  #allocation0 [shape = 'u32[]', space=smem, size = 0x4, offset = 0x4, fixed_abs, tag = 'smem constant byte address 0x4 - core index']
  #allocation1 [shape = 'u32[72,128]{1,0:T(1,128)}', space=vmem, size = 0x9000, scoped, tag = 'internal scratch']
  %s0 = inlined_call_operand.vmem [shape: f32[2,64,16], index: 0, kind: input, shape index: {}]
  %s1 = inlined_call_operand.vmem [shape: f32[2,2,256], index: 1, kind: input, shape index: {}]
  %s2 = inlined_call_operand.hbm [shape: f32[2,4,256], index: 2, kind: output, shape index: {}]
  %s3 = sld [smem:[#allocation0]]
  $region41: #{tpu_custom_call.1} parent=0
    _
  %s5 = ssub.s32 1, %s3
  %s6 = scalar_select 0, %s5, %s3
  $region1: #{tpu_custom_call.1} parent=0
    #allocation2 [shape = 'u8[4096]{0}', space=vmem, size = 0x1000, scoped, tag = 'output window, operand 0']
    #allocation3 [shape = 's32[2]{0}', space=sflag, size = 0x8, scoped, tag = 'scoped memory for tpu_custom_call.1']
    %7 = vsyncpa [#allocation3], 0
    %s8 = scalar_lea.sflag [#allocation3], 1
    %9 = vsyncpa %s8, 0
    loop: start=0, step=1, limit=6
    $region2: #{tpu_custom_call.1} parent=1 // loop_pre_header
      _
    $region3: #{tpu_custom_call.1} parent=1 // loop_header
      %s11 = sphi 0, %s15
      %p12 = scmp.ge.s32.totalorder %s11, 6
      %s18 = sphi 0, %s30
      %s19 = sphi 0, %s26
      %s20 = sphi 0, %s18
      %s21 = sphi 0, %s19
      %s22 = sphi 0, %s20
      %s23 = sphi 0, %s21
      %s33 = sphi 0, %s35
      %s36 = sphi 0, %s33
      %s37 = sphi 0, %s36
      %s53 = sphi 0, %s37
      %s61 = sphi 0, %s63
      %s64 = sphi 0, %s61
      %s65 = sphi 0, %s64
      %s81 = sphi 0, %s65
      %s89 = sphi 0, %s91
      %s92 = sphi 0, %s89
      %s93 = sphi 0, %s92
      %s109 = sphi 0, %s93
    $region4: #{tpu_custom_call.1} parent=1 // loop_header_branch
      %14 = sbr.rel (%p12) target = $region8
    $region5: #{tpu_custom_call.1} parent=1 // loop_body
      %s16 = ssub.s32 %s11, 1
      %s17 = ssub.s32 %s11, 2
      %s24 = sadd.s32 1, %s19
      %p25 = scmp.ge.s32.totalorder %s24, 2
      %s26 = scalar_select %p25, 0, %s24
      %s27 = sadd.s32 1, %s18
      %s28 = scalar_select %p25, %s27, %s18
      %p29 = scmp.ge.s32.totalorder %s28, 2
      %s30 = scalar_select %p29, 0, %s28
      %s31 = ssub.s32 %s18, %s30
      %p32 = scmp.eq.s32.totalorder %s31, 0
      %s34 = sadd.s32 %s33, 1
      %s35 = scalar_select %p32, %s33, %s34
      %p38 = pneg %p32
      %p39 = scmp.eq.s32.totalorder %s11, 3
      %p40 = por %p38, %p39
      %p41 = scmp.ne.s32.totalorder %s33, %s36
      %p42 = scmp.eq.s32.totalorder %s11, 0
      %p43 = por %p41, %p42
      %p44 = scmp.ne.s32.totalorder %s33, %s36
      %p45 = scmp.eq.s32.totalorder %s16, 3
      %p46 = por %p44, %p45
      %p47 = scmp.ne.s32.totalorder %s36, %s37
      %p48 = scmp.eq.s32.totalorder %s16, 0
      %p49 = por %p47, %p48
      %p50 = scmp.ne.s32.totalorder %s36, %s37
      %p51 = scmp.eq.s32.totalorder %s17, 3
      %p52 = por %p50, %p51
      %p54 = scmp.ne.s32.totalorder %s37, %s53
      %p55 = scmp.eq.s32.totalorder %s17, 0
      %p56 = por %p54, %p55
      %s57 = ssub.s32 %s18, %s30
      %s58 = ssub.s32 %s19, %s26
      %s59 = sor.u32 %s57, %s58
      %p60 = scmp.eq.s32.totalorder %s59, 0
      %s62 = sadd.s32 %s61, 1
      %s63 = scalar_select %p60, %s61, %s62
      %p66 = pneg %p60
      %p67 = scmp.eq.s32.totalorder %s11, 3
      %p68 = por %p66, %p67
      %p69 = scmp.ne.s32.totalorder %s61, %s64
      %p70 = scmp.eq.s32.totalorder %s11, 0
      %p71 = por %p69, %p70
      %p72 = scmp.ne.s32.totalorder %s61, %s64
      %p73 = scmp.eq.s32.totalorder %s16, 3
      %p74 = por %p72, %p73
      %p75 = scmp.ne.s32.totalorder %s64, %s65
      %p76 = scmp.eq.s32.totalorder %s16, 0
      %p77 = por %p75, %p76
      %p78 = scmp.ne.s32.totalorder %s64, %s65
      %p79 = scmp.eq.s32.totalorder %s17, 3
      %p80 = por %p78, %p79
      %p82 = scmp.ne.s32.totalorder %s65, %s81
      %p83 = scmp.eq.s32.totalorder %s17, 0
      %p84 = por %p82, %p83
      %s85 = ssub.s32 %s18, %s30
      %s86 = ssub.s32 %s19, %s26
      %s87 = sor.u32 %s85, %s86
      %p88 = scmp.eq.s32.totalorder %s87, 0
      %s90 = sadd.s32 %s89, 1
      %s91 = scalar_select %p88, %s89, %s90
      %p94 = pneg %p88
      %p95 = scmp.eq.s32.totalorder %s11, 3
      %p96 = por %p94, %p95
      %p97 = scmp.ne.s32.totalorder %s89, %s92
      %p98 = scmp.eq.s32.totalorder %s11, 0
      %p99 = por %p97, %p98
      %p100 = scmp.ne.s32.totalorder %s89, %s92
      %p101 = scmp.eq.s32.totalorder %s16, 3
      %p102 = por %p100, %p101
      %p103 = scmp.ne.s32.totalorder %s92, %s93
      %p104 = scmp.eq.s32.totalorder %s16, 0
      %p105 = por %p103, %p104
      %p106 = scmp.ne.s32.totalorder %s92, %s93
      %p107 = scmp.eq.s32.totalorder %s17, 3
      %p108 = por %p106, %p107
      %p110 = scmp.ne.s32.totalorder %s93, %s109
      %p111 = scmp.eq.s32.totalorder %s17, 0
      %p112 = por %p110, %p111
      %p113 = scmp.le.s32.totalorder 1, %s11
      %p114 = scmp.lt.s32.totalorder %s11, 5
      %p115 = pnand %p113, %p114
      %p116 = pneg %p115
      // Predicated region
      $region9: #{tpu_custom_call.1} parent=5 // pred_check
        _
      $region10: #{tpu_custom_call.1} parent=5 // pred_check_branch
        %118 = sbr.rel (%p115) target = $region12
      $region11: #{tpu_custom_call.1} parent=5 // pred_region
        %s119 = ssub.s32 %s11, 1
      $region12: #{tpu_custom_call.1} parent=5 // pred_fallthru
        _
      %p120 = scmp.lt.s32.totalorder %s11, 4
      // Predicated region
      $region13: #{tpu_custom_call.1} parent=5 // pred_check
        %p121 = pneg %p120
      $region14: #{tpu_custom_call.1} parent=5 // pred_check_branch
        %123 = sbr.rel (%p121) target = $region16
      $region15: #{tpu_custom_call.1} parent=5 // pred_region
        // Predicated region
        $region17: #{tpu_custom_call.1} parent=15 // pred_check
          %p124 = pneg %p43
        $region18: #{tpu_custom_call.1} parent=15 // pred_check_branch
          %126 = sbr.rel (%p124) target = $region20
        $region19: #{tpu_custom_call.1} parent=15 // pred_region
          %p127 = scmp.lt.s32.totalorder %s18, 1
          %s128 = scalar_select %p127, %s18, 1
          %s129 = smul.addr %s128, 8
          %s130 = smul.addr %s129, 8
          %s131 = scalar_lea.vmem %s0, %s130
        $region20: #{tpu_custom_call.1} parent=15 // pred_fallthru
          _
        // Predicated region
        $region21: #{tpu_custom_call.1} parent=15 // pred_check
          %p132 = pneg %p71
        $region22: #{tpu_custom_call.1} parent=15 // pred_check_branch
          %134 = sbr.rel (%p132) target = $region24
        $region23: #{tpu_custom_call.1} parent=15 // pred_region
          %p135 = scmp.lt.s32.totalorder %s18, 1
          %s136 = scalar_select %p135, %s18, 1
          %p137 = scmp.lt.s32.totalorder %s19, 1
          %s138 = scalar_select %p137, %s19, 1
          %s139 = smul.addr %s136, 2
          %s140 = sadd.s32 %s138, %s139
          %s141 = smul.addr %s140, 2
          %s142 = scalar_lea.vmem %s1, %s141
        $region24: #{tpu_custom_call.1} parent=15 // pred_fallthru
          _
      $region16: #{tpu_custom_call.1} parent=5 // pred_fallthru
        _
      %p143 = scmp.le.s32.totalorder 1, %s11
      %p144 = scmp.lt.s32.totalorder %s11, 5
      %p145 = pnand %p143, %p144
      %p146 = pneg %p145
      // Predicated region
      $region25: #{tpu_custom_call.1} parent=5 // pred_check
        _
      $region26: #{tpu_custom_call.1} parent=5 // pred_check_branch
        %148 = sbr.rel (%p145) target = $region28
      $region27: #{tpu_custom_call.1} parent=5 // pred_region
        %s149 = ssub.s32 %s11, 1
        %p150 = scmp.lt.s32.totalorder %s20, 1
        %s151 = scalar_select %p150, %s20, 1
        %s152 = smul.addr %s151, 8
        %s153 = smul.addr %s152, 8
        %s154 = scalar_lea.vmem %s0, %s153
        %p155 = pneg %p49
        %p156 = pneg %p46
        %p157 = scmp.lt.s32.totalorder %s20, 1
        %s158 = scalar_select %p157, %s20, 1
        %p159 = scmp.lt.s32.totalorder %s21, 1
        %s160 = scalar_select %p159, %s21, 1
        %s161 = smul.addr %s158, 2
        %s162 = sadd.s32 %s160, %s161
        %s163 = smul.addr %s162, 2
        %s164 = scalar_lea.vmem %s1, %s163
        %p165 = pneg %p77
        %p166 = pneg %p74
        %p167 = pneg %p105
        %p168 = pneg %p102
        %s169 = sand.u32 %s92, 1
        %s170 = scalar_lea.sflag [#allocation3], %s169
        %s171 = sand.u32 %s92, 1
        %s172 = smul.addr %s171, 4
        %s173 = scalar_lea.vmem [#allocation2], %s172
        %p174 = scmp.lt.s32.totalorder %s20, 1
        %s175 = scalar_select %p174, %s20, 1
        %s176 = smul.addr %s175, 8
        %s177 = smul.addr %s176, 8
        %s178 = scalar_lea.vmem %s0, %s177
        %p179 = scmp.lt.s32.totalorder %s20, 1
        %s180 = scalar_select %p179, %s20, 1
        %p181 = scmp.lt.s32.totalorder %s21, 1
        %s182 = scalar_select %p181, %s21, 1
        %s183 = smul.addr %s180, 2
        %s184 = sadd.s32 %s182, %s183
        %s185 = smul.addr %s184, 2
        %s186 = scalar_lea.vmem %s1, %s185
        %v187 = vld [vmem:[%s178] sm:$0xff]
        %v188 = vld [vmem:[%s178 + $0x8] sm:$0xff]
        %v189 = vld [vmem:[%s178 + $0x10] sm:$0xff]
        %v190 = vld [vmem:[%s178 + $0x18] sm:$0xff]
        %v191 = vld [vmem:[%s178 + $0x20] sm:$0xff]
        %v192 = vld [vmem:[%s178 + $0x28] sm:$0xff]
        %v193 = vld [vmem:[%s178 + $0x30] sm:$0xff]
        %v194 = vld [vmem:[%s178 + $0x38] sm:$0xff]
        %v195 = vld [vmem:[%s186] sm:$0x3]
        %v196 = vadd.f32 %v195, 1.0
        %v197 = vmul.f32 %v196, 7.5
        %v198 = vmax.f32 %v197, 0.0
        %v199 = vmin.f32 %v198, 15.0
        %v200 = vlaneseq
        %v201 = vshrl.u32 %v200, 7
        %v202 = vadd.s32 %v201, 8
        %v203 = vcvt.s32.f32 %v201
        %v204 = vcvt.s32.f32 %v202
        %v205 = vperm.slane %v199, 0
        %v206 = vsub.f32 %v203, %v205
        %v207 = vsub.f32 %v204, %v205
        %v208 = vand.u32 2147483647, %v206
        %v209 = vand.u32 2147483647, %v207
        %v210 = vsub.f32 1.0, %v208
        %v211 = vsub.f32 1.0, %v209
        %v212 = vmax.f32 %v210, 0.0
        %v213 = vmax.f32 %v211, 0.0
        %v214 = vperm.slane %v199, 1
        %v215 = vsub.f32 %v203, %v214
        %v216 = vsub.f32 %v204, %v214
        %v217 = vand.u32 2147483647, %v215
        %v218 = vand.u32 2147483647, %v216
        %v219 = vsub.f32 1.0, %v217
        %v220 = vsub.f32 1.0, %v218
        %v221 = vmax.f32 %v219, 0.0
        %v222 = vmax.f32 %v220, 0.0
        %vm223 = vcmask 130048
        %v225 = vsel %vm223, %v187, 0
        %v228 = vsel %vm223, %v188, 0
        %v231 = vsel %vm223, %v189, 0
        %v234 = vsel %vm223, %v190, 0
        %v237 = vsel %vm223, %v191, 0
        %v240 = vsel %vm223, %v192, 0
        %v243 = vsel %vm223, %v193, 0
        %v246 = vsel %vm223, %v194, 0
        %248 = vmatpush.msra.mxu0 0.0
        %249 = vmatpush.msra.mxu0 0.0
        %250 = vmatpush.msra.mxu0 0.0
        %251 = vmatpush.msra.mxu0 0.0
        %252 = vmatpush.msra.mxu0 0.0
        %253 = vmatpush.msra.mxu0 0.0
        %254 = vmatpush.msra.mxu0 0.0
        %255 = vmatpush.msra.mxu0 0.0
        %256 = vmatpush.msra.mxu0 0.0
        %257 = vmatpush.msra.mxu0 0.0
        %258 = vmatpush.msra.mxu0 0.0
        %259 = vmatpush.msra.mxu0 0.0
        %260 = vmatpush.msra.mxu0 0.0
        %261 = vmatpush.msra.mxu0 0.0
        %262 = vmatpush.msra.mxu0 %v213
        %263 = vmatpush.msra.mxu0 %v212
        %264 = vmatmul.f32.gmra.mxu0 %v225
        %v265 = vpop.f32.mrf.mxu0
        %v266 = vadd.f32 0.0, %v265
        %267 = vmatmul.f32.gmra.mxu0 %v228
        %v268 = vpop.f32.mrf.mxu0
        %v269 = vadd.f32 0.0, %v268
        %270 = vmatmul.f32.gmra.mxu0 %v231
        %v271 = vpop.f32.mrf.mxu0
        %v272 = vadd.f32 0.0, %v271
        %273 = vmatmul.f32.gmra.mxu0 %v234
        %v274 = vpop.f32.mrf.mxu0
        %v275 = vadd.f32 0.0, %v274
        %276 = vmatmul.f32.gmra.mxu0 %v237
        %v277 = vpop.f32.mrf.mxu0
        %v278 = vadd.f32 0.0, %v277
        %279 = vmatmul.f32.gmra.mxu0 %v240
        %v280 = vpop.f32.mrf.mxu0
        %v281 = vadd.f32 0.0, %v280
        %282 = vmatmul.f32.gmra.mxu0 %v243
        %v283 = vpop.f32.mrf.mxu0
        %v284 = vadd.f32 0.0, %v283
        %285 = vmatmul.f32.gmra.mxu0 %v246
        %v286 = vpop.f32.mrf.mxu0
        %v287 = vadd.f32 0.0, %v286
        %288 = vdwg.mxu0
        %v289 = vmul.f32 %v266, %v221
        %v290 = vmul.f32 %v269, %v222
        %v291 = vmul.f32 %v272, %v221
        %v292 = vmul.f32 %v275, %v222
        %v293 = vmul.f32 %v278, %v221
        %v294 = vmul.f32 %v281, %v222
        %v295 = vmul.f32 %v284, %v221
        %v296 = vmul.f32 %v287, %v222
        %v297 = vadd.f32 %v289, %v290
        %v298 = vrot.slane %v297, 4
        %v299 = vadd.f32 %v297, %v298
        %v300 = vrot.slane %v299, 2
        %v301 = vadd.f32 %v299, %v300
        %v302 = vrot.slane %v301, 1
        %v303 = vadd.f32 %v301, %v302
        %v304 = vadd.f32 %v291, %v292
        %v305 = vrot.slane %v304, 4
        %v306 = vadd.f32 %v304, %v305
        %v307 = vrot.slane %v306, 2
        %v308 = vadd.f32 %v306, %v307
        %v309 = vrot.slane %v308, 1
        %v310 = vadd.f32 %v308, %v309
        %v311 = vadd.f32 %v293, %v294
        %v312 = vrot.slane %v311, 4
        %v313 = vadd.f32 %v311, %v312
        %v314 = vrot.slane %v313, 2
        %v315 = vadd.f32 %v313, %v314
        %v316 = vrot.slane %v315, 1
        %v317 = vadd.f32 %v315, %v316
        %v318 = vadd.f32 %v295, %v296
        %v319 = vrot.slane %v318, 4
        %v320 = vadd.f32 %v318, %v319
        %v321 = vrot.slane %v320, 2
        %v322 = vadd.f32 %v320, %v321
        %v323 = vrot.slane %v322, 1
        %v324 = vadd.f32 %v322, %v323
        %vm329 = vcmask 1041409
        %v330 = vsel %vm329, %v310, %v303
        %vm331 = vcmask 1042434
        %v332 = vsel %vm331, %v317, %v330
        %vm333 = vcmask 1043459
        %v334 = vsel %vm333, %v324, %v332
        %336 = vst [vmem:[%s173] sm:$0xf] %v334
        %s337 = sand.u32 %s92, 1
        %s338 = scalar_lea.sflag [#allocation3], %s337
        %s339 = sand.u32 %s92, 1
        %s340 = smul.addr %s339, 4
        %s341 = scalar_lea.vmem [#allocation2], %s340
        // Predicated region
        $region29: #{tpu_custom_call.1} parent=27 // pred_check
          %p342 = pneg %p102
        $region30: #{tpu_custom_call.1} parent=27 // pred_check_branch
          %344 = sbr.rel (%p342) target = $region32
        $region31: #{tpu_custom_call.1} parent=27 // pred_region
          %346 = vsyncadd %s338, 0
          %s347 = smul.addr %s20, 2
          %s348 = sadd.s32 %s21, %s347
          %s349 = smul.addr %s348, 4
          %s350 = scalar_lea.hbm %s2, %s349
          %s352 = sshll.u32 %s341, 4
          %s353 = int_to_ptr.vmem [resolvable:$true] %s352
          %s354 = sshll.u32 %s350, 4
          %s355 = int_to_ptr.hbm [resolvable:$true] %s354
          %357 = dma.vmem_to_hbm [thread:$0]  %s353, 64, %s355, %s338
        $region32: #{tpu_custom_call.1} parent=27 // pred_fallthru
          _
      $region28: #{tpu_custom_call.1} parent=5 // pred_fallthru
        _
      %p358 = scmp.le.s32.totalorder 2, %s11
      // Predicated region
      $region33: #{tpu_custom_call.1} parent=5 // pred_check
        %p359 = pneg %p358
      $region34: #{tpu_custom_call.1} parent=5 // pred_check_branch
        %361 = sbr.rel (%p359) target = $region36
      $region35: #{tpu_custom_call.1} parent=5 // pred_region
        %s362 = ssub.s32 %s11, 2
        // Predicated region
        $region37: #{tpu_custom_call.1} parent=35 // pred_check
          %p363 = pneg %p108
        $region38: #{tpu_custom_call.1} parent=35 // pred_check_branch
          %365 = sbr.rel (%p363) target = $region40
        $region39: #{tpu_custom_call.1} parent=35 // pred_region
          %s366 = sand.u32 %s93, 1
          %s367 = scalar_lea.sflag [#allocation3], %s366
          %s368 = sand.u32 %s93, 1
          %s369 = smul.addr %s368, 4
          %s370 = scalar_lea.vmem [#allocation2], %s369
          %372 = dma.done %s367, 64
        $region40: #{tpu_custom_call.1} parent=35 // pred_fallthru
          _
      $region36: #{tpu_custom_call.1} parent=5 // pred_fallthru
        _
    $region6: #{tpu_custom_call.1} parent=1 // loop_footer
      %s15 = sadd.s32 1, %s11
    $region7: #{tpu_custom_call.1} parent=1 // loop_footer_branch
      %10 = sbr.rel target = $region3
    $region8: #{tpu_custom_call.1} parent=1 // loop_exit
      _
    %373 = vsyncpa [#allocation3], 1
    %s374 = scalar_lea.sflag [#allocation3], 1
    %375 = vsyncpa %s374, 1

</llo_original>
